<compile_context>
chip_gen: v7x
topology: tpu7x:2x2x1
jax: 0.10.0
libtpu: 0.0.40
codegen_flags: <defaults>
</compile_context>

<pallas_src>
import jax
import jax.numpy as jnp
from jax.experimental import pallas as pl
from jax.experimental.pallas import tpu as pltpu


# ------------------------------ Pallas kernel ------------------------------ #

def _hs_kernel(x_ref, o_ref):
    # hard-swish: x * clamp(x + 3, 0, 6) / 6   (compute in f32 on the VPU)
    x = x_ref[...].astype(jnp.float32)
    gate = jnp.clip(x + 3.0, 0.0, 6.0) / 6.0
    o_ref[...] = (x * gate).astype(o_ref.dtype)


# ------------------------------ host wrapper ------------------------------- #

_LANES = 128          # lane-dense last dim (full vreg width, unmasked stores)
_MAX_TILE_ROWS = 1024  # 1024 x 128 x 4B = 512 KiB per block (fits VMEM easily)


def hard_swish(x):
    """HS.forward(x) = x * clamp(x + 3, 0, 6) / 6, as one fused Pallas kernel."""
    orig_shape = x.shape
    total = x.size
    flat = x.reshape(-1)

    rows = pl.cdiv(total, _LANES)
    if rows <= _MAX_TILE_ROWS:
        # Single full-extent block (always a legal block shape).
        tile_r = rows
        rows_p = rows
    else:
        tile_r = _MAX_TILE_ROWS
        rows_p = pl.cdiv(rows, tile_r) * tile_r

    pad = rows_p * _LANES - total
    if pad:
        # hard-swish(0) == 0, padded tail is discarded afterwards anyway.
        flat = jnp.pad(flat, (0, pad))
    x2 = flat.reshape(rows_p, _LANES)

    out2 = pl.pallas_call(
        _hs_kernel,
        out_shape=jax.ShapeDtypeStruct((rows_p, _LANES), x.dtype),
        grid=(rows_p // tile_r,),
        in_specs=[pl.BlockSpec((tile_r, _LANES), lambda i: (i, 0))],
        out_specs=pl.BlockSpec((tile_r, _LANES), lambda i: (i, 0)),
        compiler_params=pltpu.CompilerParams(
            dimension_semantics=("parallel",)),
    )(x2)

    out = out2.reshape(-1)
    if pad:
        out = out[:total]
    return out.reshape(orig_shape)


def _reference(x):
    return x * jnp.clip(x + 3.0, 0.0, 6.0) / 6.0


# ------------------------------ main / test -------------------------------- #

if __name__ == "__main__":
    key = jax.random.PRNGKey(0)
    k1, k2 = jax.random.split(key)

    # Lane-aligned case: (2, 4, 16, 16) -> 2048 elems -> (16, 128) block.
    x1 = jax.random.normal(k1, (2, 4, 16, 16), jnp.float32) * 3.0
    out1 = jax.block_until_ready(jax.jit(hard_swish)(x1))
    ref1 = _reference(x1)
    assert out1.shape == x1.shape
    assert jnp.allclose(out1, ref1, rtol=1e-6, atol=1e-6), (
        f"max abs diff {float(jnp.max(jnp.abs(out1 - ref1)))}")

    # Non-aligned case exercises the padding path.
    x2 = jax.random.normal(k2, (3, 5, 7), jnp.float32) * 3.0
    out2 = jax.block_until_ready(jax.jit(hard_swish)(x2))
    ref2 = _reference(x2)
    assert out2.shape == x2.shape
    assert jnp.allclose(out2, ref2, rtol=1e-6, atol=1e-6), (
        f"max abs diff {float(jnp.max(jnp.abs(out2 - ref2)))}")

    print("KERNEL_OK")
</pallas_src>

<mosaic_0001>
module attributes {stable_mosaic.version = 11 : i64} {
  func.func @_hs_kernel(%arg0: i32, %arg1: memref<16x128xf32, #tpu.memory_space<vmem>>, %arg2: memref<16x128xf32, #tpu.memory_space<vmem>>) attributes {dimension_semantics = [#tpu.dimension_semantics<parallel>], iteration_bounds = array<i64: 1>, scalar_prefetch = 0 : i64, scratch_operands = 0 : i64, tpu.core_type = #tpu.core_type<tc>, window_params = [{transform_indices = @transform_0, window_bounds = array<i64: 16, 128>}, {transform_indices = @transform_1, window_bounds = array<i64: 16, 128>}]} {
    %c0 = arith.constant 0 : index
    %c0_0 = arith.constant 0 : index
    %0 = vector.load %arg1[%c0, %c0_0] : memref<16x128xf32, #tpu.memory_space<vmem>>, vector<16x128xf32>
    %cst = arith.constant 3.000000e+00 : f32
    %1 = vector.broadcast %cst : f32 to vector<16x128xf32>
    %2 = arith.addf %0, %1 : vector<16x128xf32>
    %cst_1 = arith.constant 0.000000e+00 : f32
    %cst_2 = arith.constant 6.000000e+00 : f32
    %3 = vector.broadcast %cst_1 : f32 to vector<16x128xf32>
    %4 = arith.maximumf %3, %2 : vector<16x128xf32>
    %5 = vector.broadcast %cst_2 : f32 to vector<16x128xf32>
    %6 = arith.minimumf %5, %4 : vector<16x128xf32>
    %cst_3 = arith.constant 6.000000e+00 : f32
    %7 = vector.broadcast %cst_3 : f32 to vector<16x128xf32>
    %8 = arith.divf %6, %7 : vector<16x128xf32>
    %9 = arith.mulf %0, %8 : vector<16x128xf32>
    %c0_4 = arith.constant 0 : index
    %c0_5 = arith.constant 0 : index
    %10 = vector.load %arg2[%c0_4, %c0_5] : memref<16x128xf32, #tpu.memory_space<vmem>>, vector<16x128xf32>
    tpu.vector_store %arg2[%c0_4, %c0_5], %9 {strides = array<i32>} : memref<16x128xf32, #tpu.memory_space<vmem>>, vector<16x128xf32>,
    return
  }
  func.func @transform_0(%arg0: i32) -> (i32, i32) {
    %c0_i32 = arith.constant 0 : i32
    %c0_i32_0 = arith.constant 0 : i32
    return %arg0, %c0_i32 : i32, i32
  }
  func.func @transform_1(%arg0: i32) -> (i32, i32) {
    %c0_i32 = arith.constant 0 : i32
    %c0_i32_0 = arith.constant 0 : i32
    return %arg0, %c0_i32 : i32, i32
  }
}

</mosaic_0001>

<llo_original>
// kernel: hard_swish.1
$region0: #{hard_swish.1}
  #allocation0 [shape = 'u32[]', space=smem, size = 0x4, offset = 0x4, fixed_abs, tag = 'smem constant byte address 0x4 - core index']
  #allocation1 [shape = 'u32[144,128]{1,0:T(1,128)}', space=vmem, size = 0x12000, scoped, tag = 'internal scratch']
  %s0 = inlined_call_operand.vmem [shape: f32[16,128], index: 0, kind: input, shape index: {}]
  %s1 = inlined_call_operand.vmem [shape: f32[16,128], index: 1, kind: output, shape index: {}]
  %s2 = sld [smem:[#allocation0]]
  $region14: #{hard_swish.1} parent=0
    _
  %s4 = ssub.s32 1, %s2
  %s5 = scalar_select 0, %s4, %s2
  // Predicated region
  $region2: #{hard_swish.1} parent=0 // pred_check
    _
  $region3: #{hard_swish.1} parent=0 // pred_check_branch
    %7 = sbr.rel (0) target = $region5
  $region4: #{hard_swish.1} parent=0 // pred_region
    _
  $region5: #{hard_swish.1} parent=0 // pred_fallthru
    _
  %v8 = vld [vmem:[%s0] sm:$0xff]
  %v9 = vld [vmem:[%s0 + $0x8] sm:$0xff]
  %v10 = vadd.f32 %v8, 3.0
  %v11 = vadd.f32 %v9, 3.0
  %v12 = vmax.f32 %v10, 0.0
  %v13 = vmax.f32 %v11, 0.0
  %v14 = vmin.f32 %v12, 6.0
  %v15 = vmin.f32 %v13, 6.0
  %v16 = vrcp.pop 6.0
  %v17 = vmul.f32 %v14, %v16
  %v18 = vmul.f32 %v15, %v16
  %v19 = vmul.f32 %v8, %v17
  %v20 = vmul.f32 %v9, %v18
  %21 = vst [vmem:[%s1] sm:$0xff] %v19
  %22 = vst [vmem:[%s1 + $0x8] sm:$0xff] %v20
  // Predicated region
  $region6: #{hard_swish.1} parent=0 // pred_check
    _
  $region7: #{hard_swish.1} parent=0 // pred_check_branch
    %24 = sbr.rel (0) target = $region9
  $region8: #{hard_swish.1} parent=0 // pred_region
    _
  $region9: #{hard_swish.1} parent=0 // pred_fallthru
    _
  // Predicated region
  $region10: #{hard_swish.1} parent=0 // pred_check
    _
  $region11: #{hard_swish.1} parent=0 // pred_check_branch
    %26 = sbr.rel (0) target = $region13
  $region12: #{hard_swish.1} parent=0 // pred_region
    _
  $region13: #{hard_swish.1} parent=0 // pred_fallthru
    _

</llo_original>
